<compile_context>
chip_gen: v5e
topology: v5e:2x2
jax: 0.10.0
libtpu: 0.0.40
codegen_flags: <defaults>
</compile_context>

<pallas_src>
import functools

import jax
import jax.numpy as jnp
from jax.experimental import pallas as pl
from jax.experimental.pallas import tpu as pltpu

# Squeezed block dims (kernel sees refs without the size-1 leading axes).
_SQ = pl.Squeezed() if hasattr(pl, "Squeezed") else None


# ----------------------------------------------------------------------------
# Kernels
# ----------------------------------------------------------------------------
def _fused_kernel(x_ref, w_ref, b_ref, o_ref, *, eps, inv_count):
    """Single-pass gLN for a whole resident (C, T) slab (one batch)."""
    x = x_ref[...].astype(jnp.float32)                       # (C, T)
    mean = jnp.sum(x, keepdims=True) * inv_count             # (1, 1)
    xm = x - mean
    var = jnp.sum(xm * xm, keepdims=True) * inv_count        # (1, 1), exact PyTorch form
    inv_std = jax.lax.rsqrt(var + eps)
    w = w_ref[...].astype(jnp.float32)                       # (C, 1)
    b = b_ref[...].astype(jnp.float32)                       # (C, 1)
    o_ref[...] = (w * (xm * inv_std) + b).astype(o_ref.dtype)


def _stats_kernel(x_ref, sum_ref, sumsq_ref, *, total_t, time_tile,
                  mask_remainder, nt):
    """Per-(batch, time-tile) partial sum(x) and sum(x*x)."""
    x = x_ref[...].astype(jnp.float32)                       # (C, TT_s)

    def _write(xv):
        sum_ref[...] = jnp.sum(xv, keepdims=True)            # (1, 1)
        sumsq_ref[...] = jnp.sum(xv * xv, keepdims=True)     # (1, 1)

    if mask_remainder:
        t = pl.program_id(1)

        @pl.when(t == nt - 1)
        def _masked_last_tile():
            col = jax.lax.broadcasted_iota(jnp.int32, x.shape, 1)
            valid = (nt - 1) * time_tile + col < total_t
            _write(jnp.where(valid, x, 0.0))

        @pl.when(t != nt - 1)
        def _unmasked():
            _write(x)
    else:
        _write(x)


def _apply_kernel(sum_ref, sumsq_ref, x_ref, w_ref, b_ref, o_ref, *,
                  eps, inv_count):
    """y = x * scale + shift; scale/shift folded from SMEM scalars per tile."""
    b = pl.program_id(0)
    s = jnp.full((1, 1), sum_ref[b], dtype=jnp.float32)
    ss = jnp.full((1, 1), sumsq_ref[b], dtype=jnp.float32)
    mean = s * inv_count
    var = jnp.maximum(ss * inv_count - mean * mean, 0.0)
    inv_std = jax.lax.rsqrt(var + eps)                       # (1, 1)
    w = w_ref[...].astype(jnp.float32)                       # (C, 1)
    bias = b_ref[...].astype(jnp.float32)                    # (C, 1)
    scale = w * inv_std                                      # (C, 1)
    shift = bias - mean * scale                              # (C, 1)
    x = x_ref[...].astype(jnp.float32)                       # (C, TT)
    o_ref[...] = (x * scale + shift).astype(o_ref.dtype)     # single FMA stream


# ----------------------------------------------------------------------------
# Sizing helpers
# ----------------------------------------------------------------------------
def _vmem_capacity_bytes(default=64 << 20):
    """Physical VMEM capacity if queryable, else conservative v7x value."""
    try:
        info = pltpu.get_tpu_info()
        cap = int(getattr(info, "vmem_capacity_bytes", 0) or 0)
        if cap > 0:
            return cap
    except Exception:
        pass
    return default


def _choose_time_tile(C, T, itemsize, target_bytes=4 << 20):
    """Lane-dense (multiple of 128) time tile sized to ~4 MiB per block."""
    target_elems = max(128, target_bytes // max(1, itemsize))
    if C * T <= target_elems:
        return T
    tt = max(128, (target_elems // C) // 128 * 128)
    return min(tt, T)


# ----------------------------------------------------------------------------
# Wrapper
# ----------------------------------------------------------------------------
def global_layer_norm(x, weight=None, bias=None, eps=1e-5, *, time_tile=None):
    """gLN forward. x: [B, C, T]; weight, bias: [C, 1]. Returns [B, C, T].

    If `time_tile` is given it is used for both passes (must be a multiple of
    128 or >= T) and the tiled two-pass path is forced.
    """
    B, C, T = x.shape
    if weight is None:                         # elementwise_affine=False
        weight = jnp.ones((C, 1), dtype=x.dtype)
    if bias is None:
        bias = jnp.zeros((C, 1), dtype=x.dtype)

    itemsize = jnp.dtype(x.dtype).itemsize
    cap = _vmem_capacity_bytes()
    vmem_limit = max(32 << 20, cap - (8 << 20))   # leave headroom below physical
    inv_count = 1.0 / float(C * T)
    cparams = lambda sem: pltpu.CompilerParams(dimension_semantics=sem,
                                               vmem_limit_bytes=vmem_limit)

    # ---------------- Fast path: whole (C, T) slab resident in VMEM ----------
    # Budget: in + out blocks double-buffered (4x slab in x dtype) plus ~2x
    # slab of f32 temporaries, kept under the raised VMEM limit.
    slab_f32 = 4 * C * T
    fused_bytes = 4 * C * T * itemsize + 2 * slab_f32
    if time_tile is None and fused_bytes <= vmem_limit:
        return pl.pallas_call(
            functools.partial(_fused_kernel, eps=float(eps), inv_count=inv_count),
            out_shape=jax.ShapeDtypeStruct((B, C, T), x.dtype),
            grid=(B,),
            in_specs=[pl.BlockSpec((_SQ, C, T), lambda b: (b, 0, 0)),
                      pl.BlockSpec((C, 1), lambda b: (0, 0)),
                      pl.BlockSpec((C, 1), lambda b: (0, 0))],
            out_specs=pl.BlockSpec((_SQ, C, T), lambda b: (b, 0, 0)),
            compiler_params=cparams(("parallel",)),
        )(x, weight, bias)

    # ---------------- Tiled two-pass path ------------------------------------
    if time_tile is not None:
        TT = max(1, min(int(time_tile), T))
        TT_s = TT                              # user override applies to both passes
    else:
        TT = _choose_time_tile(C, T, itemsize)
        TT_s = T if 2 * TT >= T else 2 * TT    # stats pass: input-only -> 2x tile

    nt = pl.cdiv(T, TT)
    nt_s = pl.cdiv(T, TT_s)
    mask_rem = (T % TT_s) != 0

    # Pass 1: per-(batch, tile) partial sum / sum-of-squares (fully parallel grid).
    part_shape = jax.ShapeDtypeStruct((B, nt_s, 1, 1), jnp.float32)
    part_spec = pl.BlockSpec((_SQ, _SQ, 1, 1), lambda b, t: (b, t, 0, 0))
    psum, psumsq = pl.pallas_call(
        functools.partial(_stats_kernel, total_t=T, time_tile=TT_s,
                          mask_remainder=mask_rem, nt=nt_s),
        out_shape=(part_shape, part_shape),
        grid=(B, nt_s),
        in_specs=[pl.BlockSpec((_SQ, C, TT_s), lambda b, t: (b, 0, t))],
        out_specs=(part_spec, part_spec),
        compiler_params=cparams(("parallel", "parallel")),
    )(x)
    sums = jnp.sum(psum, axis=(1, 2, 3))       # (B,) f32
    sumsqs = jnp.sum(psumsq, axis=(1, 2, 3))   # (B,) f32

    # Pass 2: normalize + affine; per-batch scalars arrive via SMEM.
    x_spec = pl.BlockSpec((_SQ, C, TT), lambda b, t: (b, 0, t))
    smem_spec = pl.BlockSpec(memory_space=pltpu.MemorySpace.SMEM)
    affine_spec = pl.BlockSpec((C, 1), lambda b, t: (0, 0))
    out = pl.pallas_call(
        functools.partial(_apply_kernel, eps=float(eps), inv_count=inv_count),
        out_shape=jax.ShapeDtypeStruct((B, C, T), x.dtype),
        grid=(B, nt),
        in_specs=[smem_spec, smem_spec, x_spec, affine_spec, affine_spec],
        out_specs=pl.BlockSpec((_SQ, C, TT), lambda b, t: (b, 0, t)),
        compiler_params=cparams(("parallel", "parallel")),
    )(sums, sumsqs, x, weight, bias)
    return out


def global_layer_norm_ref(x, weight, bias, eps=1e-5):
    # Pure-JAX reference mirroring the PyTorch forward exactly.
    mean = jnp.mean(x, axis=(1, 2), keepdims=True)
    var = jnp.mean((x - mean) ** 2, axis=(1, 2), keepdims=True)
    return weight[None] * (x - mean) / jnp.sqrt(var + eps) + bias[None]


if __name__ == "__main__":
    k0, k1, k2, k3 = jax.random.split(jax.random.PRNGKey(0), 4)

    # (a) Fused resident-slab path, module's deterministic init (weight=1, bias=0).
    B, C, T = 2, 4, 16
    x = jax.random.normal(k0, (B, C, T), dtype=jnp.float32)
    w1 = jnp.ones((C, 1), dtype=jnp.float32)
    b1 = jnp.zeros((C, 1), dtype=jnp.float32)
    out = jax.block_until_ready(global_layer_norm(x, w1, b1))
    ref = global_layer_norm_ref(x, w1, b1)
    assert out.shape == (B, C, T)
    assert jnp.allclose(out, ref, atol=1e-4, rtol=1e-5), "mismatch (fused path)"

    # (b) Forced tiled two-pass path: exercises the stats remainder mask
    #     (last-tile-only) and the partial edge tile in the apply pass.
    B2, C2, T2 = 2, 8, 200
    x2 = jax.random.normal(k1, (B2, C2, T2), dtype=jnp.float32)
    w2 = jax.random.normal(k2, (C2, 1), dtype=jnp.float32)
    b2 = jax.random.normal(k3, (C2, 1), dtype=jnp.float32)
    out2 = jax.block_until_ready(global_layer_norm(x2, w2, b2, time_tile=128))
    ref2 = global_layer_norm_ref(x2, w2, b2)
    assert jnp.allclose(out2, ref2, atol=1e-4, rtol=1e-5), "mismatch (tiled path)"

    # (c) Fused path with random affine params (same data as (b), auto tiling).
    out3 = jax.block_until_ready(global_layer_norm(x2, w2, b2))
    assert jnp.allclose(out3, ref2, atol=1e-4, rtol=1e-5), "mismatch (fused affine)"

    print("KERNEL_OK")
</pallas_src>

<mosaic_0001>
module attributes {stable_mosaic.version = 11 : i64} {
  func.func @_fused_kernel(%arg0: i32, %arg1: memref<1x4x16xf32, #tpu.memory_space<vmem>>, %arg2: memref<4x1xf32, #tpu.memory_space<vmem>>, %arg3: memref<4x1xf32, #tpu.memory_space<vmem>>, %arg4: memref<1x4x16xf32, #tpu.memory_space<vmem>>) attributes {dimension_semantics = [#tpu.dimension_semantics<parallel>], iteration_bounds = array<i64: 2>, scalar_prefetch = 0 : i64, scratch_operands = 0 : i64, tpu.core_type = #tpu.core_type<tc>, window_params = [{transform_indices = @transform_0, window_bounds = array<i64: 1, 4, 16>}, {pipeline_mode = #tpu.pipeline_mode<synchronous>, transform_indices = @transform_1, window_bounds = array<i64: 4, 1>}, {pipeline_mode = #tpu.pipeline_mode<synchronous>, transform_indices = @transform_2, window_bounds = array<i64: 4, 1>}, {transform_indices = @transform_3, window_bounds = array<i64: 1, 4, 16>}]} {
    %c0 = arith.constant 0 : index
    %c0_0 = arith.constant 0 : index
    %c0_1 = arith.constant 0 : index
    %0 = vector.load %arg1[%c0, %c0_0, %c0_1] : memref<1x4x16xf32, #tpu.memory_space<vmem>>, vector<1x4x16xf32>
    %1 = vector.shape_cast %0 : vector<1x4x16xf32> to vector<4x16xf32>
    %2 = vector.shape_cast %1 : vector<4x16xf32> to vector<1x4x16xf32>
    %cst = arith.constant dense<0.000000e+00> : vector<1xf32>
    %3 = vector.multi_reduction <add>, %2, %cst [1, 2] : vector<1x4x16xf32> to vector<1xf32>
    %4 = vector.shape_cast %3 : vector<1xf32> to vector<1x1x1xf32>
    %5 = vector.extract %4[0, 0, 0] : f32 from vector<1x1x1xf32>
    %6 = vector.broadcast %5 : f32 to vector<1x1xf32>
    %cst_2 = arith.constant 1.562500e-02 : f32
    %7 = vector.broadcast %cst_2 : f32 to vector<1x1xf32>
    %8 = arith.mulf %6, %7 : vector<1x1xf32>
    %9 = vector.broadcast %8 : vector<1x1xf32> to vector<4x16xf32>
    %10 = arith.subf %1, %9 : vector<4x16xf32>
    %11 = arith.mulf %10, %10 : vector<4x16xf32>
    %12 = vector.shape_cast %11 : vector<4x16xf32> to vector<1x4x16xf32>
    %cst_3 = arith.constant dense<0.000000e+00> : vector<1xf32>
    %13 = vector.multi_reduction <add>, %12, %cst_3 [1, 2] : vector<1x4x16xf32> to vector<1xf32>
    %14 = vector.shape_cast %13 : vector<1xf32> to vector<1x1x1xf32>
    %15 = vector.extract %14[0, 0, 0] : f32 from vector<1x1x1xf32>
    %16 = vector.broadcast %15 : f32 to vector<1x1xf32>
    %cst_4 = arith.constant 1.562500e-02 : f32
    %17 = vector.broadcast %cst_4 : f32 to vector<1x1xf32>
    %18 = arith.mulf %16, %17 : vector<1x1xf32>
    %cst_5 = arith.constant 9.99999974E-6 : f32
    %19 = vector.broadcast %cst_5 : f32 to vector<1x1xf32>
    %20 = arith.addf %18, %19 : vector<1x1xf32>
    %21 = math.rsqrt %20 : vector<1x1xf32>
    %c0_6 = arith.constant 0 : index
    %c0_7 = arith.constant 0 : index
    %22 = vector.load %arg2[%c0_6, %c0_7] : memref<4x1xf32, #tpu.memory_space<vmem>>, vector<4x1xf32>
    %c0_8 = arith.constant 0 : index
    %c0_9 = arith.constant 0 : index
    %23 = vector.load %arg3[%c0_8, %c0_9] : memref<4x1xf32, #tpu.memory_space<vmem>>, vector<4x1xf32>
    %24 = vector.broadcast %21 : vector<1x1xf32> to vector<4x16xf32>
    %25 = arith.mulf %10, %24 : vector<4x16xf32>
    %26 = vector.broadcast %22 : vector<4x1xf32> to vector<4x16xf32>
    %27 = arith.mulf %26, %25 : vector<4x16xf32>
    %28 = vector.broadcast %23 : vector<4x1xf32> to vector<4x16xf32>
    %29 = arith.addf %27, %28 : vector<4x16xf32>
    %c0_10 = arith.constant 0 : index
    %c0_11 = arith.constant 0 : index
    %c0_12 = arith.constant 0 : index
    %30 = vector.load %arg4[%c0_10, %c0_11, %c0_12] : memref<1x4x16xf32, #tpu.memory_space<vmem>>, vector<1x4x16xf32>
    %31 = vector.shape_cast %30 : vector<1x4x16xf32> to vector<4x16xf32>
    %32 = vector.shape_cast %29 : vector<4x16xf32> to vector<1x4x16xf32>
    tpu.vector_store %arg4[%c0_10, %c0_11, %c0_12], %32 {strides = array<i32>} : memref<1x4x16xf32, #tpu.memory_space<vmem>>, vector<1x4x16xf32>,
    return
  }
  func.func @transform_0(%arg0: i32) -> (i32, i32, i32) {
    %c0_i32 = arith.constant 0 : i32
    %c0_i32_0 = arith.constant 0 : i32
    %c0_i32_1 = arith.constant 0 : i32
    return %arg0, %c0_i32, %c0_i32_0 : i32, i32, i32
  }
  func.func @transform_1(%arg0: i32) -> (i32, i32) {
    %c0_i32 = arith.constant 0 : i32
    %c0_i32_0 = arith.constant 0 : i32
    %c0_i32_1 = arith.constant 0 : i32
    return %c0_i32, %c0_i32_0 : i32, i32
  }
  func.func @transform_2(%arg0: i32) -> (i32, i32) {
    %c0_i32 = arith.constant 0 : i32
    %c0_i32_0 = arith.constant 0 : i32
    %c0_i32_1 = arith.constant 0 : i32
    return %c0_i32, %c0_i32_0 : i32, i32
  }
  func.func @transform_3(%arg0: i32) -> (i32, i32, i32) {
    %c0_i32 = arith.constant 0 : i32
    %c0_i32_0 = arith.constant 0 : i32
    %c0_i32_1 = arith.constant 0 : i32
    return %arg0, %c0_i32, %c0_i32_0 : i32, i32, i32
  }
}

</mosaic_0001>

<llo_original>
// kernel: tpu_custom_call.1
$region0: #{tpu_custom_call.1}
  #allocation0 [shape = 'u32[]', space=smem, size = 0x4, offset = 0x4, fixed_abs, tag = 'smem constant byte address 0x4 - core index']
  #allocation1 [shape = 'u32[72,128]{1,0:T(1,128)}', space=vmem, size = 0x9000, scoped, tag = 'internal scratch']
  %s0 = inlined_call_operand.vmem [shape: f32[2,4,16], index: 0, kind: input, shape index: {}]
  %s1 = inlined_call_operand.vmem [shape: f32[4,1], index: 1, kind: input, shape index: {}]
  %s2 = inlined_call_operand.vmem [shape: f32[4,1], index: 2, kind: input, shape index: {}]
  %s3 = inlined_call_operand.hbm [shape: f32[2,4,16], index: 3, kind: output, shape index: {}]
  %s4 = sld [smem:[#allocation0]]
  $region45: #{tpu_custom_call.1} parent=0
    _
  %s6 = ssub.s32 1, %s4
  %s7 = scalar_select 0, %s6, %s4
  $region1: #{tpu_custom_call.1} parent=0
    #allocation2 [shape = 'u8[4096]{0}', space=vmem, size = 0x1000, scoped, tag = 'output window, operand 0']
    #allocation3 [shape = 's32[2]{0}', space=sflag, size = 0x8, scoped, tag = 'scoped memory for tpu_custom_call.1']
    %8 = vsyncpa [#allocation3], 0
    %s9 = scalar_lea.sflag [#allocation3], 1
    %10 = vsyncpa %s9, 0
    loop: start=0, step=1, limit=4
    $region2: #{tpu_custom_call.1} parent=1 // loop_pre_header
      _
    $region3: #{tpu_custom_call.1} parent=1 // loop_header
      %s12 = sphi 0, %s16
      %p13 = scmp.ge.s32.totalorder %s12, 4
      %s22 = sphi 0, %s24
      %s25 = sphi 0, %s22
      %s26 = sphi 0, %s25
      %s42 = sphi 0, %s26
      %s46 = sphi 0, %s46
      %s48 = sphi 0, %s46
      %s49 = sphi 0, %s48
      %s63 = sphi 0, %s49
      %s67 = sphi 0, %s67
      %s69 = sphi 0, %s67
      %s70 = sphi 0, %s69
      %s84 = sphi 0, %s70
      %s90 = sphi 0, %s92
      %s93 = sphi 0, %s90
      %s94 = sphi 0, %s93
      %s110 = sphi 0, %s94
    $region4: #{tpu_custom_call.1} parent=1 // loop_header_branch
      %15 = sbr.rel (%p13) target = $region8
    $region5: #{tpu_custom_call.1} parent=1 // loop_body
      %s17 = ssub.s32 %s12, 1
      %s18 = ssub.s32 %s12, 2
      %s19 = sadd.s32 %s12, 1
      %s20 = ssub.s32 %s12, %s19
      %p21 = scmp.eq.s32.totalorder %s20, 0
      %s23 = sadd.s32 %s22, 1
      %s24 = scalar_select %p21, %s22, %s23
      %p27 = pneg %p21
      %p28 = scmp.eq.s32.totalorder %s12, 1
      %p29 = por %p27, %p28
      %p30 = scmp.ne.s32.totalorder %s22, %s25
      %p31 = scmp.eq.s32.totalorder %s12, 0
      %p32 = por %p30, %p31
      %p33 = scmp.ne.s32.totalorder %s22, %s25
      %p34 = scmp.eq.s32.totalorder %s17, 1
      %p35 = por %p33, %p34
      %p36 = scmp.ne.s32.totalorder %s25, %s26
      %p37 = scmp.eq.s32.totalorder %s17, 0
      %p38 = por %p36, %p37
      %p39 = scmp.ne.s32.totalorder %s25, %s26
      %p40 = scmp.eq.s32.totalorder %s18, 1
      %p41 = por %p39, %p40
      %p43 = scmp.ne.s32.totalorder %s26, %s42
      %p44 = scmp.eq.s32.totalorder %s18, 0
      %p45 = por %p43, %p44
      %s47 = sadd.s32 %s46, 1
      %p50 = scmp.eq.s32.totalorder %s12, 1
      %p51 = scmp.ne.s32.totalorder %s46, %s48
      %p52 = scmp.eq.s32.totalorder %s12, 0
      %p53 = por %p51, %p52
      %p54 = scmp.ne.s32.totalorder %s46, %s48
      %p55 = scmp.eq.s32.totalorder %s17, 1
      %p56 = por %p54, %p55
      %p57 = scmp.ne.s32.totalorder %s48, %s49
      %p58 = scmp.eq.s32.totalorder %s17, 0
      %p59 = por %p57, %p58
      %p60 = scmp.ne.s32.totalorder %s48, %s49
      %p61 = scmp.eq.s32.totalorder %s18, 1
      %p62 = por %p60, %p61
      %p64 = scmp.ne.s32.totalorder %s49, %s63
      %p65 = scmp.eq.s32.totalorder %s18, 0
      %p66 = por %p64, %p65
      %s68 = sadd.s32 %s67, 1
      %p71 = scmp.eq.s32.totalorder %s12, 1
      %p72 = scmp.ne.s32.totalorder %s67, %s69
      %p73 = scmp.eq.s32.totalorder %s12, 0
      %p74 = por %p72, %p73
      %p75 = scmp.ne.s32.totalorder %s67, %s69
      %p76 = scmp.eq.s32.totalorder %s17, 1
      %p77 = por %p75, %p76
      %p78 = scmp.ne.s32.totalorder %s69, %s70
      %p79 = scmp.eq.s32.totalorder %s17, 0
      %p80 = por %p78, %p79
      %p81 = scmp.ne.s32.totalorder %s69, %s70
      %p82 = scmp.eq.s32.totalorder %s18, 1
      %p83 = por %p81, %p82
      %p85 = scmp.ne.s32.totalorder %s70, %s84
      %p86 = scmp.eq.s32.totalorder %s18, 0
      %p87 = por %p85, %p86
      %s88 = ssub.s32 %s12, %s19
      %p89 = scmp.eq.s32.totalorder %s88, 0
      %s91 = sadd.s32 %s90, 1
      %s92 = scalar_select %p89, %s90, %s91
      %p95 = pneg %p89
      %p96 = scmp.eq.s32.totalorder %s12, 1
      %p97 = por %p95, %p96
      %p98 = scmp.ne.s32.totalorder %s90, %s93
      %p99 = scmp.eq.s32.totalorder %s12, 0
      %p100 = por %p98, %p99
      %p101 = scmp.ne.s32.totalorder %s90, %s93
      %p102 = scmp.eq.s32.totalorder %s17, 1
      %p103 = por %p101, %p102
      %p104 = scmp.ne.s32.totalorder %s93, %s94
      %p105 = scmp.eq.s32.totalorder %s17, 0
      %p106 = por %p104, %p105
      %p107 = scmp.ne.s32.totalorder %s93, %s94
      %p108 = scmp.eq.s32.totalorder %s18, 1
      %p109 = por %p107, %p108
      %p111 = scmp.ne.s32.totalorder %s94, %s110
      %p112 = scmp.eq.s32.totalorder %s18, 0
      %p113 = por %p111, %p112
      %p114 = scmp.le.s32.totalorder 1, %s12
      %p115 = scmp.lt.s32.totalorder %s12, 3
      %p116 = pnand %p114, %p115
      %p117 = pneg %p116
      // Predicated region
      $region9: #{tpu_custom_call.1} parent=5 // pred_check
        _
      $region10: #{tpu_custom_call.1} parent=5 // pred_check_branch
        %119 = sbr.rel (%p116) target = $region12
      $region11: #{tpu_custom_call.1} parent=5 // pred_region
        %s120 = ssub.s32 %s12, 1
        // Predicated region
        $region13: #{tpu_custom_call.1} parent=11 // pred_check
          %p121 = pneg %p59
        $region14: #{tpu_custom_call.1} parent=11 // pred_check_branch
          %123 = sbr.rel (%p121) target = $region16
        $region15: #{tpu_custom_call.1} parent=11 // pred_region
          _
        $region16: #{tpu_custom_call.1} parent=11 // pred_fallthru
          _
        // Predicated region
        $region17: #{tpu_custom_call.1} parent=11 // pred_check
          %p124 = pneg %p80
        $region18: #{tpu_custom_call.1} parent=11 // pred_check_branch
          %126 = sbr.rel (%p124) target = $region20
        $region19: #{tpu_custom_call.1} parent=11 // pred_region
          _
        $region20: #{tpu_custom_call.1} parent=11 // pred_fallthru
          _
      $region12: #{tpu_custom_call.1} parent=5 // pred_fallthru
        _
      %p127 = scmp.lt.s32.totalorder %s12, 2
      // Predicated region
      $region21: #{tpu_custom_call.1} parent=5 // pred_check
        %p128 = pneg %p127
      $region22: #{tpu_custom_call.1} parent=5 // pred_check_branch
        %130 = sbr.rel (%p128) target = $region24
      $region23: #{tpu_custom_call.1} parent=5 // pred_region
        // Predicated region
        $region25: #{tpu_custom_call.1} parent=23 // pred_check
          %p131 = pneg %p32
        $region26: #{tpu_custom_call.1} parent=23 // pred_check_branch
          %133 = sbr.rel (%p131) target = $region28
        $region27: #{tpu_custom_call.1} parent=23 // pred_region
          %p134 = scmp.lt.s32.totalorder %s12, 1
          %s135 = scalar_select %p134, %s12, 1
          %s136 = smul.addr %s135, 4
          %s137 = scalar_lea.vmem %s0, %s136
        $region28: #{tpu_custom_call.1} parent=23 // pred_fallthru
          _
      $region24: #{tpu_custom_call.1} parent=5 // pred_fallthru
        _
      %p138 = scmp.le.s32.totalorder 1, %s12
      %p139 = scmp.lt.s32.totalorder %s12, 3
      %p140 = pnand %p138, %p139
      %p141 = pneg %p140
      // Predicated region
      $region29: #{tpu_custom_call.1} parent=5 // pred_check
        _
      $region30: #{tpu_custom_call.1} parent=5 // pred_check_branch
        %143 = sbr.rel (%p140) target = $region32
      $region31: #{tpu_custom_call.1} parent=5 // pred_region
        %s144 = ssub.s32 %s12, 1
        %p145 = scmp.lt.s32.totalorder %s17, 1
        %s146 = scalar_select %p145, %s17, 1
        %s147 = smul.addr %s146, 4
        %s148 = scalar_lea.vmem %s0, %s147
        %p149 = pneg %p38
        %p150 = pneg %p35
        %p151 = pneg %p59
        %p152 = pneg %p56
        %p153 = pneg %p80
        %p154 = pneg %p77
        %p155 = pneg %p106
        %p156 = pneg %p103
        %s157 = sand.u32 %s93, 1
        %s158 = scalar_lea.sflag [#allocation3], %s157
        %s159 = sand.u32 %s93, 1
        %s160 = smul.addr %s159, 4
        %s161 = scalar_lea.vmem [#allocation2], %s160
        %p162 = scmp.lt.s32.totalorder %s17, 1
        %s163 = scalar_select %p162, %s17, 1
        %s164 = smul.addr %s163, 4
        %s165 = scalar_lea.vmem %s0, %s164
        %v166 = vld [vmem:[%s165] sm:$0xf]
        %vm167 = vcmask 125952
        %v168 = vsel %vm167, %v166, 0.0
        %169 = vadd.xlane.f32.xlu0 %v168
        %v170 = vpop.xlane.xlu0 %169
        %v171 = vrot.slane %v170, 4
        %v172 = vadd.f32 %v170, %v171
        %v173 = vrot.slane %v172, 2
        %v174 = vadd.f32 %v172, %v173
        %v175 = vrot.slane %v174, 1
        %v176 = vadd.f32 %v174, %v175
        %s177 = vtos %v176
        %v178 = vstv %s177
        %v179 = vmul.f32 %v178, 0.015625
        %v180 = vsub.f32 %v166, %v179
        %v181 = vmul.f32 %v180, %v180
        %v182 = vsel %vm167, %v181, 0.0
        %183 = vadd.xlane.f32.xlu0 %v182
        %v184 = vpop.xlane.xlu0 %183
        %v185 = vrot.slane %v184, 4
        %v186 = vadd.f32 %v184, %v185
        %v187 = vrot.slane %v186, 2
        %v188 = vadd.f32 %v186, %v187
        %v189 = vrot.slane %v188, 1
        %v190 = vadd.f32 %v188, %v189
        %s191 = vtos %v190
        %v192 = vstv %s191
        %v193 = vmul.f32 %v192, 0.015625
        %v194 = vadd.f32 %v193, 1e-05
        %v195 = vrsqrt.pop %v194
        %v196 = vmul.f32 %v195, %v194
        %v197 = vmul.f32 %v196, %v195
        %v198 = vmul.f32 0.5, %v197
        %v199 = vsub.f32 1.5, %v198
        %v200 = vmul.f32 %v195, %v199
        %vm201 = vweird.f32 %v194
        %vm202 = vweird.f32 %v195
        %vm203 = vmor %vm201, %vm202
        %v204 = vsel %vm203, %v195, %v200
        %v205 = vld [vmem:[%s1] sm:$0xf]
        %v206 = vld [vmem:[%s2] sm:$0xf]
        %v207 = vmul.f32 %v180, %v204
        %209 = vset.pattern.permute.xlu0 0
        %210 = vperm.xlu0 %209, %v205
        %v211 = vpop.permute.xlu0 %210
        %v213 = vmul.f32 %v211, %v207
        %215 = vset.pattern.permute.xlu0 0
        %216 = vperm.xlu0 %215, %v206
        %v217 = vpop.permute.xlu0 %216
        %v219 = vadd.f32 %v213, %v217
        %220 = vst.msk [vmem:[%s161] sm:$0xf] %vm167, %v219
        %s221 = sand.u32 %s93, 1
        %s222 = scalar_lea.sflag [#allocation3], %s221
        %s223 = sand.u32 %s93, 1
        %s224 = smul.addr %s223, 4
        %s225 = scalar_lea.vmem [#allocation2], %s224
        // Predicated region
        $region33: #{tpu_custom_call.1} parent=31 // pred_check
          %p226 = pneg %p103
        $region34: #{tpu_custom_call.1} parent=31 // pred_check_branch
          %228 = sbr.rel (%p226) target = $region36
        $region35: #{tpu_custom_call.1} parent=31 // pred_region
          %230 = vsyncadd %s222, 0
          %s231 = smul.addr %s17, 4
          %s232 = scalar_lea.hbm %s3, %s231
          %s234 = sshll.u32 %s225, 4
          %s235 = int_to_ptr.vmem [resolvable:$true] %s234
          %s236 = sshll.u32 %s232, 4
          %s237 = int_to_ptr.hbm [resolvable:$true] %s236
          %239 = dma.vmem_to_hbm [thread:$0]  %s235, 64, %s237, %s222
        $region36: #{tpu_custom_call.1} parent=31 // pred_fallthru
          _
      $region32: #{tpu_custom_call.1} parent=5 // pred_fallthru
        _
      %p240 = scmp.le.s32.totalorder 2, %s12
      // Predicated region
      $region37: #{tpu_custom_call.1} parent=5 // pred_check
        %p241 = pneg %p240
      $region38: #{tpu_custom_call.1} parent=5 // pred_check_branch
        %243 = sbr.rel (%p241) target = $region40
      $region39: #{tpu_custom_call.1} parent=5 // pred_region
        %s244 = ssub.s32 %s12, 2
        // Predicated region
        $region41: #{tpu_custom_call.1} parent=39 // pred_check
          %p245 = pneg %p109
        $region42: #{tpu_custom_call.1} parent=39 // pred_check_branch
          %247 = sbr.rel (%p245) target = $region44
        $region43: #{tpu_custom_call.1} parent=39 // pred_region
          %s248 = sand.u32 %s94, 1
          %s249 = scalar_lea.sflag [#allocation3], %s248
          %s250 = sand.u32 %s94, 1
          %s251 = smul.addr %s250, 4
          %s252 = scalar_lea.vmem [#allocation2], %s251
          %254 = dma.done %s249, 64
        $region44: #{tpu_custom_call.1} parent=39 // pred_fallthru
          _
      $region40: #{tpu_custom_call.1} parent=5 // pred_fallthru
        _
    $region6: #{tpu_custom_call.1} parent=1 // loop_footer
      %s16 = sadd.s32 1, %s12
    $region7: #{tpu_custom_call.1} parent=1 // loop_footer_branch
      %11 = sbr.rel target = $region3
    $region8: #{tpu_custom_call.1} parent=1 // loop_exit
      _
    %255 = vsyncpa [#allocation3], 1
    %s256 = scalar_lea.sflag [#allocation3], 1
    %257 = vsyncpa %s256, 1

</llo_original>
